<compile_context>
chip_gen: v7x
topology: tpu7x:2x2x1
jax: 0.10.0
libtpu: 0.0.40
codegen_flags: <defaults>
</compile_context>

<pallas_src>
import functools

import jax
import jax.numpy as jnp
from jax import lax
from jax.experimental import pallas as pl
from jax.experimental.pallas import tpu as pltpu


_TEMP_TILES = 8   # conservative count of live full-tile f32 temporaries


def _step_vmem_bytes(tH, W, hb, in_bytes, out_bytes, tiled):
    """Rough per-grid-step VMEM working set: double-buffered in/out blocks,
    the two halo blocks, and the live full-tile f32 temporaries."""
    io = 2 * tH * W * (in_bytes + out_bytes)
    halo = 4 * hb * W * in_bytes if tiled else 0
    return io + halo + _TEMP_TILES * tH * W * 4


def _pick_tile_h(H, W, hb, in_bytes, out_bytes, batch):
    """Row-tile size: big HBM-streaming blocks (amortize the ~0.35us/step
    fixed cost), bounded by a budget that fits v7x's 64 MiB VMEM per core."""
    if H <= hb:
        return H
    # ~4 MiB of f32 rows per main block, rounded down to the sublane tile.
    tH = max(hb, ((4 << 20) // (4 * W)) // hb * hb)
    tH = min(tH, H)
    # Shrink until the whole per-step working set fits the budget.
    while tH > hb and _step_vmem_bytes(tH, W, hb, in_bytes, out_bytes,
                                       tiled=True) > (40 << 20):
        tH = max(hb, (tH // 2) // hb * hb)
    # With batch == 1 the row axis is the only source of grid parallelism:
    # force at least two row tiles so both v7x TensorCores get work.
    if batch == 1:
        ceil_half = -(-H // 2)
        half = -(-ceil_half // hb) * hb
        tH = min(tH, half)
    return min(tH, H)


def _stencil(x, top, bot):
    """Gradient-magnitude stencil on an f32 tile.

    x:   (tH, W) f32 tile (channel-0 rows).
    top: (1, W)  f32 row just above the tile (already zeroed at the image top).
    bot: (1, W)  f32 row just below the tile (already zeroed at the image end).
    """
    tH, W = x.shape

    # Vertical gradient: neighbour shifts built by concatenation so boundary
    # rows come straight from the halo rows (no full-tile selects).
    if tH > 1:
        x_up = jnp.concatenate([top, x[:-1, :]], axis=0)   # x_up[i] = x[i-1]
        x_dn = jnp.concatenate([x[1:, :], bot], axis=0)    # x_dn[i] = x[i+1]
    else:
        x_up, x_dn = top, bot
    v = x_dn - x_up
    acc = v * v

    # Horizontal gradient: zero column on each side (purely within-row).
    zcol = jnp.zeros((tH, 1), jnp.float32)
    if W > 1:
        x_lf = jnp.concatenate([zcol, x[:, :-1]], axis=1)  # x_lf[:,j] = x[:,j-1]
        x_rt = jnp.concatenate([x[:, 1:], zcol], axis=1)   # x_rt[:,j] = x[:,j+1]
    else:
        x_lf, x_rt = zcol, zcol
    hgrad = x_rt - x_lf
    acc = acc + hgrad * hgrad

    return jnp.sqrt(acc + 1e-6)


def _grad_kernel_single(x_ref, o_ref):
    """Whole image in one block: no halos needed, global boundaries are zero."""
    x = x_ref[...].astype(jnp.float32)
    zrow = jnp.zeros((1, x.shape[1]), jnp.float32)
    o_ref[...] = _stencil(x, zrow, zrow).astype(o_ref.dtype)


def _grad_kernel_tiled(x_ref, top_ref, bot_ref, o_ref, *, H, hb):
    """One (tH, W) row tile plus hb-row halo blocks above/below."""
    tH, W = o_ref.shape
    row0 = pl.program_id(1) * tH                     # global row of local row 0

    x = x_ref[...].astype(jnp.float32)
    if H % tH != 0:
        # Ragged last tile: its trailing rows were read out of bounds
        # (undefined data) and the matching output rows are dropped by Pallas.
        # Zero them so the "down" neighbour of the true last image row is 0.
        row = lax.broadcasted_iota(jnp.int32, (tH, 1), 0)
        x = jnp.where(row + row0 < H, x, 0.0)

    # Halo rows, zeroed when this tile touches the image top / bottom.
    top_ok = jnp.where(row0 > 0, 1.0, 0.0)
    bot_ok = jnp.where(row0 + tH < H, 1.0, 0.0)
    top = top_ref[hb - 1:hb, :].astype(jnp.float32) * top_ok   # global row row0-1
    bot = bot_ref[0:1, :].astype(jnp.float32) * bot_ok         # global row row0+tH

    o_ref[...] = _stencil(x, top, bot).astype(o_ref.dtype)


def get_gradient_nopadding(x, tile_h=None, out_dtype=jnp.float32):
    """x: [B, C, H, W] (any float dtype) -> [B, 1, H, W] in `out_dtype`."""
    B, C, H, W = x.shape
    in_bytes = jnp.dtype(x.dtype).itemsize
    out_bytes = jnp.dtype(out_dtype).itemsize
    # Sublane tile / halo height for the input dtype: 8 rows for 4-byte,
    # 16 for 2-byte, 32 for 1-byte dtypes.
    hb = max(8, 32 // max(in_bytes, 1))

    if tile_h is not None:
        tH = min(int(tile_h), H)
        if tH < H and tH % hb != 0:
            raise ValueError(
                f"tile_h must be a multiple of {hb} for "
                f"{jnp.dtype(x.dtype).name} inputs when tiling H")
    else:
        tH = _pick_tile_h(H, W, hb, in_bytes, out_bytes, B)
    nh = pl.cdiv(H, tH)

    vmem_limit = int(min(
        max(_step_vmem_bytes(tH, W, hb, in_bytes, out_bytes, tiled=nh > 1)
            + (16 << 20), 32 << 20),
        56 << 20))                    # stays under v7x's 64 MiB physical VMEM

    out_shape = jax.ShapeDtypeStruct((B, 1, H, W), out_dtype)

    if nh == 1:
        # Whole image in one block: no halo inputs, x passed once.
        return pl.pallas_call(
            _grad_kernel_single,
            out_shape=out_shape,
            grid=(B,),
            in_specs=[pl.BlockSpec((None, None, H, W), lambda b: (b, 0, 0, 0))],
            out_specs=pl.BlockSpec((None, None, H, W), lambda b: (b, 0, 0, 0)),
            compiler_params=pltpu.CompilerParams(
                dimension_semantics=("parallel",),
                vmem_limit_bytes=vmem_limit),
        )(x)

    # Multi-tile path: each step gets a (tH, W) tile plus two hb-row halo
    # blocks (the previous tile's last row / the next tile's first row).
    bpt = tH // hb                     # hb-blocks per row tile
    n_hb = pl.cdiv(H, hb)
    top_map = lambda b, h: (b, 0, jnp.maximum(h * bpt - 1, 0), 0)
    bot_map = lambda b, h: (b, 0, jnp.minimum((h + 1) * bpt, n_hb - 1), 0)

    kernel = functools.partial(_grad_kernel_tiled, H=H, hb=hb)
    return pl.pallas_call(
        kernel,
        out_shape=out_shape,
        grid=(B, nh),
        in_specs=[
            # main tile: channel 0 selected via squeezed BlockSpec dims
            pl.BlockSpec((None, None, tH, W), lambda b, h: (b, 0, h, 0)),
            pl.BlockSpec((None, None, hb, W), top_map),   # halo above
            pl.BlockSpec((None, None, hb, W), bot_map),   # halo below
        ],
        out_specs=pl.BlockSpec((None, None, tH, W), lambda b, h: (b, 0, h, 0)),
        compiler_params=pltpu.CompilerParams(
            dimension_semantics=("parallel", "parallel"),
            vmem_limit_bytes=vmem_limit),
    )(x, x, x)


def _reference(x):
    """Pure-JAX reference (mirrors torch.F.conv2d with padding=1)."""
    x0 = x[:, 0].astype(jnp.float32)  # [B, H, W]
    xp = jnp.pad(x0, ((0, 0), (1, 1), (1, 1)))
    v = xp[:, 2:, 1:-1] - xp[:, :-2, 1:-1]
    h = xp[:, 1:-1, 2:] - xp[:, 1:-1, :-2]
    return jnp.sqrt(v * v + h * h + 1e-6)[:, None]


if __name__ == "__main__":
    # Primary small-shape check (single-tile, no-halo path).
    x = jax.random.normal(jax.random.PRNGKey(0), (2, 4, 16, 16), jnp.float32)
    out = jax.block_until_ready(get_gradient_nopadding(x))
    assert out.shape == (2, 1, 16, 16)
    assert jnp.allclose(out, _reference(x), atol=1e-5, rtol=1e-5)

    # Multi-tile (halo) path: 3 even row tiles of 8.
    x2 = jax.random.normal(jax.random.PRNGKey(1), (1, 3, 24, 16), jnp.float32)
    out2 = jax.block_until_ready(get_gradient_nopadding(x2, tile_h=8))
    assert jnp.allclose(out2, _reference(x2), atol=1e-5, rtol=1e-5)

    # Multi-tile + ragged last tile (H=20 with 8-row tiles).
    x3 = jax.random.normal(jax.random.PRNGKey(2), (1, 2, 20, 16), jnp.float32)
    out3 = jax.block_until_ready(get_gradient_nopadding(x3, tile_h=8))
    assert jnp.allclose(out3, _reference(x3), atol=1e-5, rtol=1e-5)

    # Auto-tiled B == 1 path (forced >= 2 row tiles so both v7x cores work).
    x4 = jax.random.normal(jax.random.PRNGKey(3), (1, 1, 32, 128), jnp.float32)
    out4 = jax.block_until_ready(get_gradient_nopadding(x4))
    assert jnp.allclose(out4, _reference(x4), atol=1e-5, rtol=1e-5)

    print("KERNEL_OK")
</pallas_src>

<mosaic_0001>
module attributes {stable_mosaic.version = 11 : i64} {
  func.func @_grad_kernel_single(%arg0: i32, %arg1: memref<1x1x16x16xf32, #tpu.memory_space<vmem>>, %arg2: memref<1x1x16x16xf32, #tpu.memory_space<vmem>>) attributes {dimension_semantics = [#tpu.dimension_semantics<parallel>], iteration_bounds = array<i64: 2>, scalar_prefetch = 0 : i64, scratch_operands = 0 : i64, tpu.core_type = #tpu.core_type<tc>, window_params = [{transform_indices = @transform_0, window_bounds = array<i64: 1, 1, 16, 16>}, {transform_indices = @transform_1, window_bounds = array<i64: 1, 1, 16, 16>}]} {
    %c0 = arith.constant 0 : index
    %c0_0 = arith.constant 0 : index
    %c0_1 = arith.constant 0 : index
    %c0_2 = arith.constant 0 : index
    %0 = vector.load %arg1[%c0, %c0_0, %c0_1, %c0_2] : memref<1x1x16x16xf32, #tpu.memory_space<vmem>>, vector<1x1x16x16xf32>
    %1 = vector.shape_cast %0 : vector<1x1x16x16xf32> to vector<16x16xf32>
    %cst = arith.constant 0.000000e+00 : f32
    %2 = vector.broadcast %cst : f32 to vector<1x16xf32>
    %3 = vector.extract_strided_slice %1 {offsets = [0, 0], sizes = [15, 16], strides = [1, 1]} : vector<16x16xf32> to vector<15x16xf32>
    %4 = tpu.concatenate %2, %3 in 0 : vector<1x16xf32>, vector<15x16xf32> -> vector<16x16xf32>
    %5 = vector.extract_strided_slice %1 {offsets = [1, 0], sizes = [15, 16], strides = [1, 1]} : vector<16x16xf32> to vector<15x16xf32>
    %6 = tpu.concatenate %5, %2 in 0 : vector<15x16xf32>, vector<1x16xf32> -> vector<16x16xf32>
    %7 = arith.subf %6, %4 : vector<16x16xf32>
    %8 = arith.mulf %7, %7 : vector<16x16xf32>
    %cst_3 = arith.constant 0.000000e+00 : f32
    %9 = vector.broadcast %cst_3 : f32 to vector<16x1xf32>
    %10 = vector.extract_strided_slice %1 {offsets = [0, 0], sizes = [16, 15], strides = [1, 1]} : vector<16x16xf32> to vector<16x15xf32>
    %11 = tpu.concatenate %9, %10 in 1 : vector<16x1xf32>, vector<16x15xf32> -> vector<16x16xf32>
    %12 = vector.extract_strided_slice %1 {offsets = [0, 1], sizes = [16, 15], strides = [1, 1]} : vector<16x16xf32> to vector<16x15xf32>
    %13 = tpu.concatenate %12, %9 in 1 : vector<16x15xf32>, vector<16x1xf32> -> vector<16x16xf32>
    %14 = arith.subf %13, %11 : vector<16x16xf32>
    %15 = arith.mulf %14, %14 : vector<16x16xf32>
    %16 = arith.addf %8, %15 : vector<16x16xf32>
    %cst_4 = arith.constant 9.99999997E-7 : f32
    %17 = vector.broadcast %cst_4 : f32 to vector<16x16xf32>
    %18 = arith.addf %16, %17 : vector<16x16xf32>
    %19 = math.sqrt %18 : vector<16x16xf32>
    %c0_5 = arith.constant 0 : index
    %c0_6 = arith.constant 0 : index
    %c0_7 = arith.constant 0 : index
    %c0_8 = arith.constant 0 : index
    %20 = vector.load %arg2[%c0_5, %c0_6, %c0_7, %c0_8] : memref<1x1x16x16xf32, #tpu.memory_space<vmem>>, vector<1x1x16x16xf32>
    %21 = vector.shape_cast %20 : vector<1x1x16x16xf32> to vector<16x16xf32>
    %22 = vector.shape_cast %19 : vector<16x16xf32> to vector<1x1x16x16xf32>
    tpu.vector_store %arg2[%c0_5, %c0_6, %c0_7, %c0_8], %22 {strides = array<i32>} : memref<1x1x16x16xf32, #tpu.memory_space<vmem>>, vector<1x1x16x16xf32>,
    return
  }
  func.func @transform_0(%arg0: i32) -> (i32, i32, i32, i32) {
    %c0_i32 = arith.constant 0 : i32
    %c0_i32_0 = arith.constant 0 : i32
    %c0_i32_1 = arith.constant 0 : i32
    %c0_i32_2 = arith.constant 0 : i32
    return %arg0, %c0_i32, %c0_i32_0, %c0_i32_1 : i32, i32, i32, i32
  }
  func.func @transform_1(%arg0: i32) -> (i32, i32, i32, i32) {
    %c0_i32 = arith.constant 0 : i32
    %c0_i32_0 = arith.constant 0 : i32
    %c0_i32_1 = arith.constant 0 : i32
    %c0_i32_2 = arith.constant 0 : i32
    return %arg0, %c0_i32, %c0_i32_0, %c0_i32_1 : i32, i32, i32, i32
  }
}

</mosaic_0001>

<llo_original>
// kernel: tpu_custom_call.1
$region0: #{tpu_custom_call.1}
  #allocation0 [shape = 'u32[]', space=smem, size = 0x4, offset = 0x4, fixed_abs, tag = 'smem constant byte address 0x4 - core index']
  #allocation1 [shape = 'u32[144,128]{1,0:T(1,128)}', space=vmem, size = 0x12000, scoped, tag = 'internal scratch']
  %s0 = inlined_call_operand.hbm [shape: f32[2,4,16,16], index: 0, kind: input, shape index: {}]
  %s1 = inlined_call_operand.hbm [shape: f32[2,1,16,16], index: 1, kind: output, shape index: {}]
  %s2 = sld [smem:[#allocation0]]
  $region41: #{tpu_custom_call.1} parent=0
    _
  %s4 = ssub.s32 1, %s2
  %s5 = scalar_select 0, %s4, %s2
  $region1: #{tpu_custom_call.1} parent=0
    #allocation2 [shape = 'u8[16384]{0}', space=vmem, size = 0x4000, scoped, tag = 'input window, operand 0']
    #allocation3 [shape = 's32[2]{0}', space=sflag, size = 0x8, scoped, tag = 'scoped memory for tpu_custom_call.1']
    #allocation4 [shape = 's32[2]{0}', space=sflag, size = 0x8, scoped, tag = 'scoped memory for tpu_custom_call.1']
    #allocation5 [shape = 'u8[16384]{0}', space=vmem, size = 0x4000, scoped, tag = 'output window, operand 0']
    %6 = vsyncpa [#allocation3], 0
    %s7 = scalar_lea.sflag [#allocation3], 1
    %8 = vsyncpa %s7, 0
    %9 = vsyncpa [#allocation4], 0
    %s10 = scalar_lea.sflag [#allocation4], 1
    %11 = vsyncpa %s10, 0
    loop: start=0, step=1, limit=4
    $region2: #{tpu_custom_call.1} parent=1 // loop_pre_header
      _
    $region3: #{tpu_custom_call.1} parent=1 // loop_header
      %s13 = sphi 0, %s17
      %p14 = scmp.ge.s32.totalorder %s13, 4
      %s23 = sphi 0, %s25
      %s26 = sphi 0, %s23
      %s27 = sphi 0, %s26
      %s43 = sphi 0, %s27
      %s49 = sphi 0, %s51
      %s52 = sphi 0, %s49
      %s53 = sphi 0, %s52
      %s69 = sphi 0, %s53
    $region4: #{tpu_custom_call.1} parent=1 // loop_header_branch
      %16 = sbr.rel (%p14) target = $region8
    $region5: #{tpu_custom_call.1} parent=1 // loop_body
      %s18 = ssub.s32 %s13, 1
      %s19 = ssub.s32 %s13, 2
      %s20 = sadd.s32 %s13, 1
      %s21 = ssub.s32 %s13, %s20
      %p22 = scmp.eq.s32.totalorder %s21, 0
      %s24 = sadd.s32 %s23, 1
      %s25 = scalar_select %p22, %s23, %s24
      %p28 = pneg %p22
      %p29 = scmp.eq.s32.totalorder %s13, 1
      %p30 = por %p28, %p29
      %p31 = scmp.ne.s32.totalorder %s23, %s26
      %p32 = scmp.eq.s32.totalorder %s13, 0
      %p33 = por %p31, %p32
      %p34 = scmp.ne.s32.totalorder %s23, %s26
      %p35 = scmp.eq.s32.totalorder %s18, 1
      %p36 = por %p34, %p35
      %p37 = scmp.ne.s32.totalorder %s26, %s27
      %p38 = scmp.eq.s32.totalorder %s18, 0
      %p39 = por %p37, %p38
      %p40 = scmp.ne.s32.totalorder %s26, %s27
      %p41 = scmp.eq.s32.totalorder %s19, 1
      %p42 = por %p40, %p41
      %p44 = scmp.ne.s32.totalorder %s27, %s43
      %p45 = scmp.eq.s32.totalorder %s19, 0
      %p46 = por %p44, %p45
      %s47 = ssub.s32 %s13, %s20
      %p48 = scmp.eq.s32.totalorder %s47, 0
      %s50 = sadd.s32 %s49, 1
      %s51 = scalar_select %p48, %s49, %s50
      %p54 = pneg %p48
      %p55 = scmp.eq.s32.totalorder %s13, 1
      %p56 = por %p54, %p55
      %p57 = scmp.ne.s32.totalorder %s49, %s52
      %p58 = scmp.eq.s32.totalorder %s13, 0
      %p59 = por %p57, %p58
      %p60 = scmp.ne.s32.totalorder %s49, %s52
      %p61 = scmp.eq.s32.totalorder %s18, 1
      %p62 = por %p60, %p61
      %p63 = scmp.ne.s32.totalorder %s52, %s53
      %p64 = scmp.eq.s32.totalorder %s18, 0
      %p65 = por %p63, %p64
      %p66 = scmp.ne.s32.totalorder %s52, %s53
      %p67 = scmp.eq.s32.totalorder %s19, 1
      %p68 = por %p66, %p67
      %p70 = scmp.ne.s32.totalorder %s53, %s69
      %p71 = scmp.eq.s32.totalorder %s19, 0
      %p72 = por %p70, %p71
      %p73 = scmp.le.s32.totalorder 1, %s13
      %p74 = scmp.lt.s32.totalorder %s13, 3
      %p75 = pnand %p73, %p74
      %p76 = pneg %p75
      // Predicated region
      $region9: #{tpu_custom_call.1} parent=5 // pred_check
        _
      $region10: #{tpu_custom_call.1} parent=5 // pred_check_branch
        %78 = sbr.rel (%p75) target = $region12
      $region11: #{tpu_custom_call.1} parent=5 // pred_region
        %s79 = ssub.s32 %s13, 1
      $region12: #{tpu_custom_call.1} parent=5 // pred_fallthru
        _
      %p80 = scmp.lt.s32.totalorder %s13, 2
      // Predicated region
      $region13: #{tpu_custom_call.1} parent=5 // pred_check
        %p81 = pneg %p80
      $region14: #{tpu_custom_call.1} parent=5 // pred_check_branch
        %83 = sbr.rel (%p81) target = $region16
      $region15: #{tpu_custom_call.1} parent=5 // pred_region
        // Predicated region
        $region17: #{tpu_custom_call.1} parent=15 // pred_check
          %p84 = pneg %p33
        $region18: #{tpu_custom_call.1} parent=15 // pred_check_branch
          %86 = sbr.rel (%p84) target = $region20
        $region19: #{tpu_custom_call.1} parent=15 // pred_region
          %s87 = sand.u32 %s23, 1
          %s88 = scalar_lea.sflag [#allocation3], %s87
          %s89 = sand.u32 %s23, 1
          %s90 = smul.addr %s89, 16
          %s91 = scalar_lea.vmem [#allocation2], %s90
          %s93 = ssub.s32 256, 256
          %94 = vsyncadd %s88, %s93
          %s95 = smul.addr %s13, 8
          %s96 = smul.addr %s95, 128
          %s97 = scalar_lea.hbm %s0, %s96
          %s98 = sshll.u32 %s91, 4
          %s99 = int_to_ptr.vmem [resolvable:$true] %s98
          %104 = dma.hbm_to_vmem [thread:$0]  %s97, 256, %s99, %s88, 128, 128, 8
        $region20: #{tpu_custom_call.1} parent=15 // pred_fallthru
          _
      $region16: #{tpu_custom_call.1} parent=5 // pred_fallthru
        _
      %p105 = scmp.le.s32.totalorder 1, %s13
      %p106 = scmp.lt.s32.totalorder %s13, 3
      %p107 = pnand %p105, %p106
      %p108 = pneg %p107
      // Predicated region
      $region21: #{tpu_custom_call.1} parent=5 // pred_check
        _
      $region22: #{tpu_custom_call.1} parent=5 // pred_check_branch
        %110 = sbr.rel (%p107) target = $region24
      $region23: #{tpu_custom_call.1} parent=5 // pred_region
        %s111 = ssub.s32 %s13, 1
        %s112 = sand.u32 %s26, 1
        %s113 = scalar_lea.sflag [#allocation3], %s112
        %s114 = sand.u32 %s26, 1
        %s115 = smul.addr %s114, 16
        %s116 = scalar_lea.vmem [#allocation2], %s115
        // Predicated region
        $region25: #{tpu_custom_call.1} parent=23 // pred_check
          %p117 = pneg %p39
        $region26: #{tpu_custom_call.1} parent=23 // pred_check_branch
          %119 = sbr.rel (%p117) target = $region28
        $region27: #{tpu_custom_call.1} parent=23 // pred_region
          %120 = dma.done %s113, 256
        $region28: #{tpu_custom_call.1} parent=23 // pred_fallthru
          _
        %s121 = sand.u32 %s26, 1
        %s122 = scalar_lea.sflag [#allocation3], %s121
        %s123 = sand.u32 %s26, 1
        %s124 = smul.addr %s123, 16
        %s125 = scalar_lea.vmem [#allocation2], %s124
        %p126 = pneg %p39
        %p127 = pneg %p36
        %p128 = pneg %p65
        %p129 = pneg %p62
        %s130 = sand.u32 %s52, 1
        %s131 = scalar_lea.sflag [#allocation4], %s130
        %s132 = sand.u32 %s52, 1
        %s133 = smul.addr %s132, 16
        %s134 = scalar_lea.vmem [#allocation5], %s133
        %v135 = vld [vmem:[%s116] sm:$0xff]
        %v136 = vld [vmem:[%s116 + $0x8] sm:$0xff]
        %vm139 = vcmask 1040384
        %v140 = vrot.slane %v135, 7
        %v141 = vrot.slane %v136, 7
        %v142 = vsel %vm139, %v140, %v141
        %v145 = vsel %vm139, 0.0, %v140
        %vm146 = vcmask 1046528
        %v147 = vrot.slane %v135, 1
        %v148 = vrot.slane %v136, 1
        %v149 = vsel %vm146, %v147, %v148
        %v152 = vsel %vm146, %v148, 0.0
        %v153 = vsub.f32 %v149, %v145
        %v154 = vsub.f32 %v152, %v142
        %v155 = vmul.f32 %v153, %v153
        %v156 = vmul.f32 %v154, %v154
        %157 = vrot.lane.b32.xlu0 %v135, 1
        %v158 = vpop.permute.xlu0 %157
        %159 = vrot.lane.b32.xlu0 %v136, 1
        %v160 = vpop.permute.xlu0 %159
        %vm163 = vcmask 7168
        %v164 = vsel %vm163, 0.0, %v158
        %v165 = vsel %vm163, 0.0, %v160
        %166 = vrot.lane.b32.xlu0 %v135, 127
        %v167 = vpop.permute.xlu0 %166
        %168 = vrot.lane.b32.xlu0 %v136, 127
        %v169 = vpop.permute.xlu0 %168
        %vm172 = vcmask 121856
        %v173 = vsel %vm172, %v167, 0.0
        %v174 = vsel %vm172, %v169, 0.0
        %v175 = vsub.f32 %v173, %v164
        %v176 = vsub.f32 %v174, %v165
        %v177 = vmul.f32 %v175, %v175
        %v178 = vmul.f32 %v176, %v176
        %v179 = vadd.f32 %v155, %v177
        %v180 = vadd.f32 %v156, %v178
        %v181 = vadd.f32 %v179, 1e-06
        %v182 = vadd.f32 %v180, 1e-06
        %v183 = vrsqrt.pop %v181
        %v184 = vmul.f32 %v181, %v183
        %vm185 = vcmp.eq.f32.partialorder %v181, inf
        %v186 = vsel %vm185, %v181, %v184
        %vm187 = vcmp.eq.f32.partialorder %v181, 0.0
        %v188 = vand.u32 %v181, 2147483648
        %v189 = vsel %vm187, %v188, %v186
        %v190 = vrsqrt.pop %v182
        %v191 = vmul.f32 %v182, %v190
        %vm192 = vcmp.eq.f32.partialorder %v182, inf
        %v193 = vsel %vm192, %v182, %v191
        %vm194 = vcmp.eq.f32.partialorder %v182, 0.0
        %v195 = vand.u32 %v182, 2147483648
        %v196 = vsel %vm194, %v195, %v193
        %vm197 = vcmask 130048
        %198 = vst.msk [vmem:[%s134] sm:$0xff] %vm197, %v189
        %199 = vst.msk [vmem:[%s134 + $0x8] sm:$0xff] %vm197, %v196
        %s200 = sand.u32 %s52, 1
        %s201 = scalar_lea.sflag [#allocation4], %s200
        %s202 = sand.u32 %s52, 1
        %s203 = smul.addr %s202, 16
        %s204 = scalar_lea.vmem [#allocation5], %s203
        // Predicated region
        $region29: #{tpu_custom_call.1} parent=23 // pred_check
          %p205 = pneg %p62
        $region30: #{tpu_custom_call.1} parent=23 // pred_check_branch
          %207 = sbr.rel (%p205) target = $region32
        $region31: #{tpu_custom_call.1} parent=23 // pred_region
          %s209 = ssub.s32 256, 256
          %210 = vsyncadd %s201, %s209
          %s211 = smul.addr %s18, 2
          %s212 = smul.addr %s211, 128
          %s213 = scalar_lea.hbm %s1, %s212
          %s214 = sshll.u32 %s204, 4
          %s215 = int_to_ptr.vmem [resolvable:$true] %s214
          %220 = dma.vmem_to_hbm [thread:$0]  %s215, 256, %s213, %s201, 128, 128, 8
        $region32: #{tpu_custom_call.1} parent=23 // pred_fallthru
          _
      $region24: #{tpu_custom_call.1} parent=5 // pred_fallthru
        _
      %p221 = scmp.le.s32.totalorder 2, %s13
      // Predicated region
      $region33: #{tpu_custom_call.1} parent=5 // pred_check
        %p222 = pneg %p221
      $region34: #{tpu_custom_call.1} parent=5 // pred_check_branch
        %224 = sbr.rel (%p222) target = $region36
      $region35: #{tpu_custom_call.1} parent=5 // pred_region
        %s225 = ssub.s32 %s13, 2
        // Predicated region
        $region37: #{tpu_custom_call.1} parent=35 // pred_check
          %p226 = pneg %p68
        $region38: #{tpu_custom_call.1} parent=35 // pred_check_branch
          %228 = sbr.rel (%p226) target = $region40
        $region39: #{tpu_custom_call.1} parent=35 // pred_region
          %s229 = sand.u32 %s53, 1
          %s230 = scalar_lea.sflag [#allocation4], %s229
          %s231 = sand.u32 %s53, 1
          %s232 = smul.addr %s231, 16
          %s233 = scalar_lea.vmem [#allocation5], %s232
          %234 = dma.done %s230, 256
        $region40: #{tpu_custom_call.1} parent=35 // pred_fallthru
          _
      $region36: #{tpu_custom_call.1} parent=5 // pred_fallthru
        _
    $region6: #{tpu_custom_call.1} parent=1 // loop_footer
      %s17 = sadd.s32 1, %s13
    $region7: #{tpu_custom_call.1} parent=1 // loop_footer_branch
      %12 = sbr.rel target = $region3
    $region8: #{tpu_custom_call.1} parent=1 // loop_exit
      _
    %235 = vsyncpa [#allocation3], 1
    %s236 = scalar_lea.sflag [#allocation3], 1
    %237 = vsyncpa %s236, 1
    %238 = vsyncpa [#allocation4], 1
    %s239 = scalar_lea.sflag [#allocation4], 1
    %240 = vsyncpa %s239, 1

</llo_original>
